<compile_context>
chip_gen: v5e
topology: v5e:2x2
jax: 0.10.0
libtpu: 0.0.40
codegen_flags: <defaults>
</compile_context>

<pallas_src>
import functools
import math

import jax
import jax.numpy as jnp
from jax import lax
from jax.experimental import pallas as pl
from jax.experimental.pallas import tpu as pltpu


# ----------------------------------------------------------------------------
# Kernel
# ----------------------------------------------------------------------------
def _mlp_kernel(layer_dims, row_offs, chunk, n_chunks,
                params_ref, xT_ref, outT_ref):
    """Feature-major MLP over one batch tile.

    params_ref : (P_rows, P_cols) packed params; layer l's weight is
                 rows [row_offs[l] : row_offs[l]+out_l], cols [0:in_l];
                 its bias is column in_l of the same rows.
    xT_ref     : (in_dim, tb)   activations, batch on lanes.
    outT_ref   : (out_dim, tb)  lane-dense output.
    """
    n_layers = len(layer_dims)

    # Hoist the tiny (<1 KB) parameter loads once per grid step.
    ws, bs = [], []
    for l, (in_l, out_l) in enumerate(layer_dims):
        r0 = row_offs[l]
        ws.append(params_ref[r0:r0 + out_l, 0:in_l])            # (out_l, in_l)
        bs.append(params_ref[r0:r0 + out_l, in_l:in_l + 1])     # (out_l, 1)

    def chunk_body(c, carry):
        off = c * chunk
        if chunk % 128 == 0:
            off = pl.multiple_of(off, 128)
        h = xT_ref[:, pl.ds(off, chunk)].astype(jnp.float32)    # (in_dim, chunk)
        for l in range(n_layers):
            # (out_l, in_l) @ (in_l, chunk) -> (out_l, chunk) on the MXU, f32 acc.
            z = jnp.dot(ws[l], h, preferred_element_type=jnp.float32) + bs[l]
            if l < n_layers - 1:
                # sigmoid(z) = 0.5*tanh(0.5*z) + 0.5  -- one EUP push per element.
                h = 0.5 * jnp.tanh(0.5 * z) + 0.5
            else:
                h = z                                            # ln_out: linear
        outT_ref[:, pl.ds(off, chunk)] = h.astype(outT_ref.dtype)
        return carry

    lax.fori_loop(0, n_chunks, chunk_body, 0, unroll=True)


# ----------------------------------------------------------------------------
# Parameter packing (one resident block instead of 6 pipelined operands)
# ----------------------------------------------------------------------------
def pack_params(weights, biases):
    """Pack PyTorch-layout weights [out,in] and biases [out,1] into one array.

    Layer l occupies rows [row_offs[l] : row_offs[l]+out_l] (8-aligned starts);
    its weight sits in cols [0:in_l] and its bias in col in_l.
    """
    out_dims = [int(w.shape[0]) for w in weights]
    in_dims = [int(w.shape[1]) for w in weights]

    row_offs, r = [], 0
    for o in out_dims:
        row_offs.append(r)
        r += ((o + 7) // 8) * 8
    n_rows = max(r, 8)
    n_cols = max(i + 1 for i in in_dims)

    p = jnp.zeros((n_rows, n_cols), jnp.float32)
    for l, (w, b) in enumerate(zip(weights, biases)):
        o, i = int(w.shape[0]), int(w.shape[1])
        p = p.at[row_offs[l]:row_offs[l] + o, 0:i].set(w.astype(jnp.float32))
        p = p.at[row_offs[l]:row_offs[l] + o, i].set(
            jnp.reshape(b, (-1,)).astype(jnp.float32))

    layer_dims = tuple(zip(in_dims, out_dims))
    return p, tuple(row_offs), layer_dims


# ----------------------------------------------------------------------------
# Wrappers
# ----------------------------------------------------------------------------
def mlp_forward_t(x_t, weights, biases, *, block_b=8192, lane_chunk=2048,
                  out_dtype=None, min_rows_for_core_split=2048):
    """Feature-major forward pass: x_t is [in_dim, B] -> returns [out_dim, B].

    No wrapper-side transposes; the batch axis stays on the lane axis end to end.
    Pass bf16 x_t / out_dtype=jnp.bfloat16 to halve HBM traffic if reduced
    precision is acceptable (compute stays f32 in-kernel).
    """
    in_dim, B = x_t.shape
    out_dim = int(weights[-1].shape[0])
    out_dtype = x_t.dtype if out_dtype is None else out_dtype

    params, row_offs, layer_dims = pack_params(weights, biases)

    # ---- batch-tile selection ------------------------------------------
    tb = min(int(block_b), B)
    if B >= min_rows_for_core_split:
        # Keep grid >= 2 so the "parallel" axis actually shards over both
        # TensorCores on v7x (no effect on single-TC v5e/v6e).
        half = -(-B // 2)
        half_aligned = ((half + 127) // 128) * 128
        tb = min(tb, half_aligned)
    if tb < B:
        tb = max(128, (tb // 128) * 128)       # (.,128) BlockSpec constraint
    grid = (pl.cdiv(B, tb),)

    # ---- lane-chunk loop inside the tile (bounds vreg pressure) ---------
    chunk = min(int(lane_chunk), tb)
    if tb % chunk != 0:
        chunk = tb
    n_chunks = tb // chunk

    # ---- specs -----------------------------------------------------------
    in_specs = [
        pl.BlockSpec(params.shape, lambda i: (0, 0)),     # whole param block resident
        pl.BlockSpec((in_dim, tb), lambda i: (0, i)),     # lane-dense activation tile
    ]
    out_spec = pl.BlockSpec((out_dim, tb), lambda i: (0, i))

    # Advisory cost hint so XLA schedules/overlaps this call sensibly.
    flops = 2 * B * sum(o * i for i, o in layer_dims)
    transcendentals = B * sum(o for _, o in layer_dims[:-1])   # one tanh / hidden unit
    bytes_accessed = (
        int(x_t.size) * x_t.dtype.itemsize
        + int(params.size) * params.dtype.itemsize
        + B * out_dim * jnp.dtype(out_dtype).itemsize
    )

    kernel = functools.partial(_mlp_kernel, layer_dims, row_offs, chunk, n_chunks)

    out_t = pl.pallas_call(
        kernel,
        out_shape=jax.ShapeDtypeStruct((out_dim, B), out_dtype),
        grid_spec=pltpu.PrefetchScalarGridSpec(
            num_scalar_prefetch=0,
            grid=grid,
            in_specs=in_specs,
            out_specs=out_spec,
        ),
        compiler_params=pltpu.CompilerParams(
            dimension_semantics=("parallel",),        # batch tiles -> both TCs on v7x
            vmem_limit_bytes=32 * 1024 * 1024,        # safe on v7x 64 MiB and v5e/v6e
        ),
        cost_estimate=pl.CostEstimate(
            flops=int(flops),
            transcendentals=int(transcendentals),
            bytes_accessed=int(bytes_accessed),
        ),
    )(params, x_t)

    return out_t


def mlp_forward(x, weights, biases, **kwargs):
    """Batch-major convenience wrapper ([B, in_dim] -> [B, out_dim]).

    NOTE: the two transposes are separate HBM passes -- at large B prefer
    calling `mlp_forward_t` with feature-major data directly.
    """
    return mlp_forward_t(x.T, weights, biases, **kwargs).T


# ----------------------------------------------------------------------------
# Init + pure-JAX reference (semantics of the PyTorch Model.forward)
# ----------------------------------------------------------------------------
def init_params(key, in_dim, h_dim, out_dim):
    """nn.Linear-style U(-1/sqrt(fan_in), 1/sqrt(fan_in)); weights [out,in], biases [out,1]."""
    dims = [in_dim] + list(h_dim) + [out_dim]
    weights, biases = [], []
    for l in range(len(dims) - 1):
        fan_in, fan_out = dims[l], dims[l + 1]
        key, kw, kb = jax.random.split(key, 3)
        bound = 1.0 / math.sqrt(fan_in)
        w = jax.random.uniform(kw, (fan_out, fan_in), jnp.float32, -bound, bound)
        b = jax.random.uniform(kb, (fan_out, 1), jnp.float32, -bound, bound)
        weights.append(w)
        biases.append(b)
    return weights, biases


def mlp_reference(x, weights, biases):
    """Pure-JAX reference matching Model.forward: sigmoid after every layer but the last."""
    h = x
    n = len(weights)
    for l in range(n):
        z = h @ weights[l].T + biases[l].T
        h = jax.nn.sigmoid(z) if l < n - 1 else z
    return h


# ----------------------------------------------------------------------------
if __name__ == "__main__":
    # Model(in_dim=4, h_dim=[32, 16], out_dim=4) -- small deterministic test.
    in_dim, h_dim, out_dim = 4, [32, 16], 4

    key = jax.random.PRNGKey(0)
    key, kx1, kx2 = jax.random.split(key, 3)
    weights, biases = init_params(key, in_dim, h_dim, out_dim)

    # Case 1: tiny batch, single grid step (feature-major entry point).
    batch = 8
    x = jax.random.normal(kx1, (batch, in_dim), dtype=jnp.float32)
    out_t = mlp_forward_t(x.T, weights, biases)
    out_t = jax.block_until_ready(out_t)
    out = out_t.T
    ref = mlp_reference(x, weights, biases)
    assert out.shape == (batch, out_dim)
    assert jnp.allclose(out, ref, atol=1e-5, rtol=1e-5), "mismatch vs reference (B=8)"

    # Case 2: multi-step grid with a padded tail block (exercises tiling path).
    batch2 = 300
    x2 = jax.random.normal(kx2, (batch2, in_dim), dtype=jnp.float32)
    out2 = mlp_forward(x2, weights, biases, block_b=128)
    out2 = jax.block_until_ready(out2)
    ref2 = mlp_reference(x2, weights, biases)
    assert out2.shape == (batch2, out_dim)
    assert jnp.allclose(out2, ref2, atol=1e-5, rtol=1e-5), "mismatch vs reference (B=300)"

    print("KERNEL_OK")
</pallas_src>

<mosaic_0001>
module attributes {stable_mosaic.version = 11 : i64} {
  func.func @_mlp_kernel(%arg0: i32, %arg1: memref<56x33xf32, #tpu.memory_space<vmem>>, %arg2: memref<4x8xf32, #tpu.memory_space<vmem>>, %arg3: memref<4x8xf32, #tpu.memory_space<vmem>>) attributes {dimension_semantics = [#tpu.dimension_semantics<parallel>], iteration_bounds = array<i64: 1>, scalar_prefetch = 0 : i64, scratch_operands = 0 : i64, tpu.core_type = #tpu.core_type<tc>, window_params = [{pipeline_mode = #tpu.pipeline_mode<synchronous>, transform_indices = @transform_0, window_bounds = array<i64: 56, 33>}, {transform_indices = @transform_1, window_bounds = array<i64: 4, 8>}, {transform_indices = @transform_2, window_bounds = array<i64: 4, 8>}]} {
    %c0 = arith.constant 0 : index
    %c0_0 = arith.constant 0 : index
    %0 = vector.load %arg1[%c0, %c0_0] : memref<56x33xf32, #tpu.memory_space<vmem>>, vector<32x4xf32>
    %c0_1 = arith.constant 0 : index
    %c4 = arith.constant 4 : index
    %1 = vector.load %arg1[%c0_1, %c4] : memref<56x33xf32, #tpu.memory_space<vmem>>, vector<32x1xf32>
    %c32 = arith.constant 32 : index
    %c0_2 = arith.constant 0 : index
    %2 = vector.load %arg1[%c32, %c0_2] : memref<56x33xf32, #tpu.memory_space<vmem>>, vector<16x32xf32>
    %c32_3 = arith.constant 32 : index
    %c32_4 = arith.constant 32 : index
    %3 = vector.load %arg1[%c32_3, %c32_4] : memref<56x33xf32, #tpu.memory_space<vmem>>, vector<16x1xf32>
    %c48 = arith.constant 48 : index
    %c0_5 = arith.constant 0 : index
    %4 = vector.load %arg1[%c48, %c0_5] : memref<56x33xf32, #tpu.memory_space<vmem>>, vector<4x16xf32>
    %c48_6 = arith.constant 48 : index
    %c16 = arith.constant 16 : index
    %5 = vector.load %arg1[%c48_6, %c16] : memref<56x33xf32, #tpu.memory_space<vmem>>, vector<4x1xf32>
    %c0_i32 = arith.constant 0 : i32
    %c8_i32 = arith.constant 8 : i32
    %6 = arith.muli %c0_i32, %c8_i32 : i32
    %c0_7 = arith.constant 0 : index
    %7 = arith.index_cast %6 : i32 to index
    %8 = vector.load %arg2[%c0_7, %7] : memref<4x8xf32, #tpu.memory_space<vmem>>, vector<4x8xf32>
    %cst = arith.constant dense<0.000000e+00> : vector<32x8xf32>
    %9 = tpu.matmul %0, %8, %cst {dimension_numbers = #tpu.dot_dimension_numbers<[1], [0], [0], [1], [0, 0, 1, 1], [], []>} : vector<32x4xf32>, vector<4x8xf32>, vector<32x8xf32> -> vector<32x8xf32>
    %10 = vector.broadcast %1 : vector<32x1xf32> to vector<32x8xf32>
    %11 = arith.addf %9, %10 : vector<32x8xf32>
    %cst_8 = arith.constant 5.000000e-01 : f32
    %12 = vector.broadcast %cst_8 : f32 to vector<32x8xf32>
    %13 = arith.mulf %12, %11 : vector<32x8xf32>
    %14 = math.tanh %13 : vector<32x8xf32>
    %cst_9 = arith.constant 5.000000e-01 : f32
    %15 = vector.broadcast %cst_9 : f32 to vector<32x8xf32>
    %16 = arith.mulf %15, %14 : vector<32x8xf32>
    %cst_10 = arith.constant 5.000000e-01 : f32
    %17 = vector.broadcast %cst_10 : f32 to vector<32x8xf32>
    %18 = arith.addf %16, %17 : vector<32x8xf32>
    %cst_11 = arith.constant dense<0.000000e+00> : vector<16x8xf32>
    %19 = tpu.matmul %2, %18, %cst_11 {dimension_numbers = #tpu.dot_dimension_numbers<[1], [0], [0], [1], [0, 0, 1, 1], [], []>} : vector<16x32xf32>, vector<32x8xf32>, vector<16x8xf32> -> vector<16x8xf32>
    %20 = vector.broadcast %3 : vector<16x1xf32> to vector<16x8xf32>
    %21 = arith.addf %19, %20 : vector<16x8xf32>
    %cst_12 = arith.constant 5.000000e-01 : f32
    %22 = vector.broadcast %cst_12 : f32 to vector<16x8xf32>
    %23 = arith.mulf %22, %21 : vector<16x8xf32>
    %24 = math.tanh %23 : vector<16x8xf32>
    %cst_13 = arith.constant 5.000000e-01 : f32
    %25 = vector.broadcast %cst_13 : f32 to vector<16x8xf32>
    %26 = arith.mulf %25, %24 : vector<16x8xf32>
    %cst_14 = arith.constant 5.000000e-01 : f32
    %27 = vector.broadcast %cst_14 : f32 to vector<16x8xf32>
    %28 = arith.addf %26, %27 : vector<16x8xf32>
    %cst_15 = arith.constant dense<0.000000e+00> : vector<4x8xf32>
    %29 = tpu.matmul %4, %28, %cst_15 {dimension_numbers = #tpu.dot_dimension_numbers<[1], [0], [0], [1], [0, 0, 1, 1], [], []>} : vector<4x16xf32>, vector<16x8xf32>, vector<4x8xf32> -> vector<4x8xf32>
    %30 = vector.broadcast %5 : vector<4x1xf32> to vector<4x8xf32>
    %31 = arith.addf %29, %30 : vector<4x8xf32>
    %c0_16 = arith.constant 0 : index
    %32 = arith.index_cast %6 : i32 to index
    %33 = vector.load %arg3[%c0_16, %32] : memref<4x8xf32, #tpu.memory_space<vmem>>, vector<4x8xf32>
    tpu.vector_store %arg3[%c0_16, %32], %31 {strides = array<i32>} : memref<4x8xf32, #tpu.memory_space<vmem>>, vector<4x8xf32>,
    %c1_i32 = arith.constant 1 : i32
    return
  }
  func.func @transform_0(%arg0: i32) -> (i32, i32) {
    %c0_i32 = arith.constant 0 : i32
    %c0_i32_0 = arith.constant 0 : i32
    %c0_i32_1 = arith.constant 0 : i32
    return %c0_i32, %c0_i32_0 : i32, i32
  }
  func.func @transform_1(%arg0: i32) -> (i32, i32) {
    %c0_i32 = arith.constant 0 : i32
    %c0_i32_0 = arith.constant 0 : i32
    return %c0_i32, %arg0 : i32, i32
  }
  func.func @transform_2(%arg0: i32) -> (i32, i32) {
    %c0_i32 = arith.constant 0 : i32
    %c0_i32_0 = arith.constant 0 : i32
    return %c0_i32, %arg0 : i32, i32
  }
}

</mosaic_0001>

<llo_original>
// kernel: tpu_custom_call.1
$region0: #{tpu_custom_call.1}
  #allocation0 [shape = 'u32[]', space=smem, size = 0x4, offset = 0x4, fixed_abs, tag = 'smem constant byte address 0x4 - core index']
  #allocation1 [shape = 'u32[72,128]{1,0:T(1,128)}', space=vmem, size = 0x9000, scoped, tag = 'internal scratch']
  %s0 = inlined_call_operand.vmem [shape: f32[56,33], index: 0, kind: input, shape index: {}]
  %s1 = inlined_call_operand.vmem [shape: f32[4,8], index: 1, kind: input, shape index: {}]
  %s2 = inlined_call_operand.hbm [shape: f32[4,8], index: 2, kind: output, shape index: {}]
  %s3 = sld [smem:[#allocation0]]
  $region18: #{tpu_custom_call.1} parent=0
    _
  %s5 = ssub.s32 1, %s3
  %s6 = scalar_select 0, %s5, %s3
  $region1: #{tpu_custom_call.1} parent=0
    #allocation2 [shape = 'u8[2048]{0}', space=vmem, size = 0x800, scoped, tag = 'output window, operand 0, single buffered']
    #allocation3 [shape = 's32[1]{0}', space=sflag, size = 0x4, scoped, tag = 'scoped memory for tpu_custom_call.1']
    %7 = vsyncpa [#allocation3], 0
    // Predicated region
    $region2: #{tpu_custom_call.1} parent=1 // pred_check
      _
    $region3: #{tpu_custom_call.1} parent=1 // pred_check_branch
      %9 = sbr.rel (0) target = $region5
    $region4: #{tpu_custom_call.1} parent=1 // pred_region
      _
    $region5: #{tpu_custom_call.1} parent=1 // pred_fallthru
      _
    // Predicated region
    $region6: #{tpu_custom_call.1} parent=1 // pred_check
      _
    $region7: #{tpu_custom_call.1} parent=1 // pred_check_branch
      %11 = sbr.rel (0) target = $region9
    $region8: #{tpu_custom_call.1} parent=1 // pred_region
      _
    $region9: #{tpu_custom_call.1} parent=1 // pred_fallthru
      _
    %v12 = vld [vmem:[%s0] sm:$0xff]
    %v13 = vld [vmem:[%s0 + $0x8] sm:$0xff]
    %v14 = vld [vmem:[%s0 + $0x10] sm:$0xff]
    %v15 = vld [vmem:[%s0 + $0x18] sm:$0xff]
    %v16 = vld [vmem:[%s0 + $0x20] sm:$0xff]
    %v17 = vld [vmem:[%s0 + $0x28] sm:$0xff]
    %v18 = vld [vmem:[%s0 + $0x30] sm:$0xf]
    %v19 = vld [vmem:[%s1] sm:$0xf]
    %21 = vset.pattern.permute.xlu0 4
    %22 = vperm.xlu0 %21, %v12
    %v23 = vpop.permute.xlu0 %22
    %26 = vset.pattern.permute.xlu0 4
    %27 = vperm.xlu0 %26, %v13
    %v28 = vpop.permute.xlu0 %27
    %31 = vset.pattern.permute.xlu0 4
    %32 = vperm.xlu0 %31, %v14
    %v33 = vpop.permute.xlu0 %32
    %36 = vset.pattern.permute.xlu0 4
    %37 = vperm.xlu0 %36, %v15
    %v38 = vpop.permute.xlu0 %37
    %vm40 = vcmask 31744
    %v41 = vsel %vm40, %v12, 0
    %v43 = vsel %vm40, %v13, 0
    %v45 = vsel %vm40, %v14, 0
    %v47 = vsel %vm40, %v15, 0
    %vm49 = vcmask 1043456
    %v51 = vsel %vm49, %v19, 0
    %53 = vmatpush.msra.mxu0 0.0
    %54 = vmatpush.msra.mxu0 0.0
    %55 = vmatpush.msra.mxu0 0.0
    %56 = vmatpush.msra.mxu0 0.0
    %57 = vmatpush.msra.mxu0 0.0
    %58 = vmatpush.msra.mxu0 0.0
    %59 = vmatpush.msra.mxu0 0.0
    %60 = vmatpush.msra.mxu0 0.0
    %61 = vmatpush.msra.mxu0 0.0
    %62 = vmatpush.msra.mxu0 0.0
    %63 = vmatpush.msra.mxu0 0.0
    %64 = vmatpush.msra.mxu0 0.0
    %65 = vmatpush.msra.mxu0 0.0
    %66 = vmatpush.msra.mxu0 0.0
    %67 = vmatpush.msra.mxu0 0.0
    %68 = vmatpush.msra.mxu0 %v51
    %69 = vmatmul.f32.gmra.mxu0 %v41
    %v70 = vpop.f32.mrf.mxu0
    %v71 = vadd.f32 %v23, %v70
    %72 = vmatmul.f32.gmra.mxu0 %v43
    %v73 = vpop.f32.mrf.mxu0
    %v74 = vadd.f32 %v28, %v73
    %75 = vmatmul.f32.gmra.mxu0 %v45
    %v76 = vpop.f32.mrf.mxu0
    %v77 = vadd.f32 %v33, %v76
    %78 = vmatmul.f32.gmra.mxu0 %v47
    %v79 = vpop.f32.mrf.mxu0
    %v80 = vadd.f32 %v38, %v79
    %81 = vdwg.mxu0
    %v82 = vmul.f32 %v71, 0.5
    %v83 = vmul.f32 %v74, 0.5
    %v84 = vmul.f32 %v77, 0.5
    %v85 = vmul.f32 %v80, 0.5
    %v86 = vtanh.pop %v82
    %v87 = vtanh.pop %v83
    %v88 = vtanh.pop %v84
    %v89 = vtanh.pop %v85
    %v90 = vmul.f32 %v86, 0.5
    %v91 = vmul.f32 %v87, 0.5
    %v92 = vmul.f32 %v88, 0.5
    %v93 = vmul.f32 %v89, 0.5
    %v94 = vadd.f32 %v90, 0.5
    %v95 = vadd.f32 %v91, 0.5
    %v96 = vadd.f32 %v92, 0.5
    %v97 = vadd.f32 %v93, 0.5
    %99 = vset.pattern.permute.xlu0 32
    %100 = vperm.xlu0 %99, %v16
    %v101 = vpop.permute.xlu0 %100
    %104 = vset.pattern.permute.xlu0 32
    %105 = vperm.xlu0 %104, %v17
    %v106 = vpop.permute.xlu0 %105
    %vm108 = vcmask 261120
    %v109 = vsel %vm108, %v16, 0
    %v111 = vsel %vm108, %v17, 0
    %113 = vmatpush.msra.mxu0 0.0
    %114 = vmatpush.msra.mxu0 0.0
    %115 = vmatpush.msra.mxu0 0.0
    %116 = vmatpush.msra.mxu0 0.0
    %117 = vmatpush.msra.mxu0 0.0
    %118 = vmatpush.msra.mxu0 0.0
    %119 = vmatpush.msra.mxu0 0.0
    %120 = vmatpush.msra.mxu0 0.0
    %121 = vmatpush.msra.mxu0 0.0
    %122 = vmatpush.msra.mxu0 0.0
    %123 = vmatpush.msra.mxu0 0.0
    %124 = vmatpush.msra.mxu0 0.0
    %125 = vmatpush.msra.mxu0 %v97
    %126 = vmatpush.msra.mxu0 %v96
    %127 = vmatpush.msra.mxu0 %v95
    %128 = vmatpush.msra.mxu0 %v94
    %129 = vmatmul.f32.gmra.mxu0 %v109
    %v130 = vpop.f32.mrf.mxu0
    %v131 = vadd.f32 %v101, %v130
    %132 = vmatmul.f32.gmra.mxu0 %v111
    %v133 = vpop.f32.mrf.mxu0
    %v134 = vadd.f32 %v106, %v133
    %135 = vdwg.mxu0
    %v136 = vmul.f32 %v131, 0.5
    %v137 = vmul.f32 %v134, 0.5
    %v138 = vtanh.pop %v136
    %v139 = vtanh.pop %v137
    %v140 = vmul.f32 %v138, 0.5
    %v141 = vmul.f32 %v139, 0.5
    %v142 = vadd.f32 %v140, 0.5
    %v143 = vadd.f32 %v141, 0.5
    %145 = vset.pattern.permute.xlu0 16
    %146 = vperm.xlu0 %145, %v18
    %v147 = vpop.permute.xlu0 %146
    %vm149 = vcmask 130048
    %v150 = vsel %vm149, %v18, 0
    %152 = vmatpush.msra.mxu0 0.0
    %153 = vmatpush.msra.mxu0 0.0
    %154 = vmatpush.msra.mxu0 0.0
    %155 = vmatpush.msra.mxu0 0.0
    %156 = vmatpush.msra.mxu0 0.0
    %157 = vmatpush.msra.mxu0 0.0
    %158 = vmatpush.msra.mxu0 0.0
    %159 = vmatpush.msra.mxu0 0.0
    %160 = vmatpush.msra.mxu0 0.0
    %161 = vmatpush.msra.mxu0 0.0
    %162 = vmatpush.msra.mxu0 0.0
    %163 = vmatpush.msra.mxu0 0.0
    %164 = vmatpush.msra.mxu0 0.0
    %165 = vmatpush.msra.mxu0 0.0
    %166 = vmatpush.msra.mxu0 %v143
    %167 = vmatpush.msra.mxu0 %v142
    %168 = vmatmul.f32.gmra.mxu0 %v150
    %v169 = vpop.f32.mrf.mxu0
    %v170 = vadd.f32 %v147, %v169
    %171 = vdwg.mxu0
    %vm172 = vcmask 60416
    %173 = vst.msk [vmem:[#allocation2] sm:$0xf] %vm172, %v170
    // Predicated region
    $region10: #{tpu_custom_call.1} parent=1 // pred_check
      _
    $region11: #{tpu_custom_call.1} parent=1 // pred_check_branch
      %175 = sbr.rel (0) target = $region13
    $region12: #{tpu_custom_call.1} parent=1 // pred_region
      %177 = vsyncadd [#allocation3], 0
      %s179 = sshll.u32 [#allocation2], 4
      %s180 = int_to_ptr.vmem [resolvable:$true] %s179
      %s181 = sshll.u32 %s2, 4
      %s182 = int_to_ptr.hbm [resolvable:$true] %s181
      %184 = dma.vmem_to_hbm [thread:$0]  %s180, 64, %s182, [#allocation3]
    $region13: #{tpu_custom_call.1} parent=1 // pred_fallthru
      _
    // Predicated region
    $region14: #{tpu_custom_call.1} parent=1 // pred_check
      _
    $region15: #{tpu_custom_call.1} parent=1 // pred_check_branch
      %186 = sbr.rel (0) target = $region17
    $region16: #{tpu_custom_call.1} parent=1 // pred_region
      %188 = dma.done [#allocation3], 64
    $region17: #{tpu_custom_call.1} parent=1 // pred_fallthru
      _
    %189 = vsyncpa [#allocation3], 1

</llo_original>
